<compile_context>
chip_gen: v7x
topology: tpu7x:2x2x1
jax: 0.10.0
libtpu: 0.0.40
codegen_flags: <defaults>
</compile_context>

<pallas_src>
import jax
import jax.numpy as jnp
from jax.experimental import pallas as pl
from jax.experimental.pallas import tpu as pltpu

HIDDEN = 256  # fixed by the module: nn.Linear(input_dim, 256)


def _round_up(n, m):
    return ((n + m - 1) // m) * m


def _mlp_kernel(x_ref, w1_ref, b1_ref, w2_ref, b2_ref, o_ref):
    """One batch tile: relu(x @ W1 + b1) @ W2 + b2, with W2 given as a (1, H) row.

    o_ref is a lane-dense (1, tile_b) block (row `i` of the (num_tiles, tile_b)
    output).
    """
    # fc1 on the MXU, f32 accumulation.
    h = jnp.dot(x_ref[...], w1_ref[...], preferred_element_type=jnp.float32)
    h = jnp.maximum(h + b1_ref[...].astype(jnp.float32), 0.0)
    # fc2 (H -> 1): VPU multiply + XLU lane reduction; VALU/XLU have slack
    # since the kernel is DMA/overhead-bound and fc1 owns the MXU.
    y = jnp.sum(h * w2_ref[...].astype(jnp.float32), axis=-1)       # (tile_b,)
    y = y[None, :] + b2_ref[...].astype(jnp.float32)                # (1, tile_b)
    o_ref[...] = y.astype(o_ref.dtype)


def _pick_tile_b(batch, d, x_dtype, w_dtype, out_dtype, requested):
    """Largest batch tile that (a) fits a portable VMEM budget (incl. v7x's
    64 MiB), (b) respects the dtype's sublane multiple, and (c) keeps >= 2 grid
    steps when the batch allows it (so 'parallel' can use both v7x cores)."""
    x_item = jnp.dtype(x_dtype).itemsize
    w_item = jnp.dtype(w_dtype).itemsize
    o_item = jnp.dtype(out_dtype).itemsize
    sublane = max(8, 32 // x_item)          # f32 -> 8, bf16 -> 16, int8/fp8 -> 32

    # Portable Pallas-buffer budget: fits comfortably inside the 32 MiB limit
    # requested below (v5e scoped default is only 16 MiB, v7x physical 64 MiB).
    budget = 24 * 1024 * 1024
    # Pallas double-buffers every operand; the constant-index weights/biases
    # therefore cost 2x (we budget for it instead of using pl.Buffered(1)).
    resident = 2 * (d * HIDDEN + 3 * HIDDEN + 1) * w_item
    per_row = 2 * (d * x_item + o_item)     # double-buffered x row + out lane
    cap = max(sublane, (budget - resident) // per_row)

    tile = min(int(requested), int(cap))
    if batch >= 2 * sublane:
        # keep at least 2 (roughly balanced) grid steps for v7x dual-TC sharding
        tile = min(tile, _round_up(pl.cdiv(batch, 2), sublane))
    tile = max(sublane, (tile // sublane) * sublane)
    tile = min(tile, _round_up(batch, sublane))
    return tile


def teacher_model3_forward(x, w1, b1, w2, b2, *, tile_b=8192, compute_dtype=None):
    """Forward pass of TeacherModel3.

    x : (B, D)        activations
    w1: (D, H)        fc1 weight (transposed vs. torch)
    b1: (H,)/(1, H)   fc1 bias
    w2: (H, 1)        fc2 weight (transposed vs. torch)
    b2: (1,)/(1, 1)   fc2 bias
    compute_dtype: e.g. jnp.bfloat16 to halve HBM bytes on the streamed x
                   (accumulation stays f32); None keeps input dtypes.
    returns (B, 1)
    """
    B, D = x.shape
    H = w1.shape[1]
    assert H == HIDDEN and w2.shape[0] == H and w2.shape[-1] == 1

    b1 = jnp.reshape(b1, (1, H))
    w2_row = jnp.reshape(w2, (1, H))            # (H, 1) -> (1, H), same element order
    b2 = jnp.reshape(b2, (1, 1)).astype(jnp.float32)

    if compute_dtype is not None:
        x = x.astype(compute_dtype)
        w1 = w1.astype(compute_dtype)
        w2_row = w2_row.astype(compute_dtype)

    out_dtype = x.dtype
    tile_b = _pick_tile_b(B, D, x.dtype, w1.dtype, out_dtype, tile_b)
    num_tiles = pl.cdiv(B, tile_b)              # ragged last tile handled by Pallas
    # NOTE: no host-side jnp.pad of x -- the padded rows of the edge block are
    # per-row garbage that never reaches the returned output (sliced [:B]).

    x_item = jnp.dtype(x.dtype).itemsize
    w_item = jnp.dtype(w1.dtype).itemsize
    cost = pl.CostEstimate(
        flops=2 * B * D * H + 2 * B * H,
        transcendentals=0,
        bytes_accessed=(B * D * x_item
                        + (D * H + 2 * H) * w_item
                        + (H + 1) * 4
                        + B * jnp.dtype(out_dtype).itemsize),
    )

    out = pl.pallas_call(
        _mlp_kernel,
        out_shape=jax.ShapeDtypeStruct((num_tiles, tile_b), out_dtype),
        grid=(num_tiles,),
        in_specs=[
            pl.BlockSpec((tile_b, D), lambda i: (i, 0)),   # x: streamed over batch
            pl.BlockSpec((D, H), lambda i: (0, 0)),        # w1: VMEM-resident
            pl.BlockSpec((1, H), lambda i: (0, 0)),        # b1: VMEM-resident
            pl.BlockSpec((1, H), lambda i: (0, 0)),        # w2 row: VMEM-resident
            pl.BlockSpec((1, 1), lambda i: (0, 0)),        # b2: VMEM-resident
        ],
        out_specs=pl.BlockSpec((1, tile_b), lambda i: (i, 0)),  # lane-dense output
        compiler_params=pltpu.CompilerParams(
            dimension_semantics=("parallel",),      # batch tiles may shard across TCs
            vmem_limit_bytes=32 * 1024 * 1024,      # bump v5e's 16 MiB default; within v7x 64 MiB
        ),
        cost_estimate=cost,
    )(x, w1, b1, w2_row, b2)

    # (num_tiles, tile_b) -> (B, 1); garbage rows of the ragged tile are dropped.
    return out.reshape(num_tiles * tile_b, 1)[:B]


def init_params(key, input_dim, hidden_dim, output_dim):
    """Deterministic init mimicking PyTorch nn.Linear default U(-1/sqrt(fan_in), +)."""
    k1, k2, k3, k4 = jax.random.split(key, 4)
    bound1 = 1.0 / jnp.sqrt(float(input_dim))
    bound2 = 1.0 / jnp.sqrt(float(hidden_dim))
    w1 = jax.random.uniform(k1, (input_dim, hidden_dim), jnp.float32, -bound1, bound1)
    b1 = jax.random.uniform(k2, (1, hidden_dim), jnp.float32, -bound1, bound1)
    w2 = jax.random.uniform(k3, (hidden_dim, output_dim), jnp.float32, -bound2, bound2)
    b2 = jax.random.uniform(k4, (1, output_dim), jnp.float32, -bound2, bound2)
    return w1, b1, w2, b2


if __name__ == "__main__":
    # Small shapes consistent with the module: batch=8, input_dim=32,
    # hidden=256 (fixed by the module), output_dim=1.
    B, D, H, O = 8, 32, 256, 1

    key = jax.random.PRNGKey(0)
    kx, kx2, kp = jax.random.split(key, 3)
    x = jax.random.normal(kx, (B, D), jnp.float32)
    w1, b1, w2, b2 = init_params(kp, D, H, O)

    def ref_fn(xx, ww1, bb1, ww2, bb2):
        return jnp.maximum(xx @ ww1 + bb1, 0.0) @ ww2 + bb2

    out = jax.block_until_ready(teacher_model3_forward(x, w1, b1, w2, b2))
    ref = ref_fn(x, w1, b1, w2, b2)
    assert out.shape == (B, O)
    assert jnp.allclose(out, ref, atol=1e-5, rtol=1e-5)

    # Ragged batch (not a multiple of the tile) -> exercises the edge-block path
    # with no host-side pad.
    B2 = 20
    x2 = jax.random.normal(kx2, (B2, D), jnp.float32)
    out2 = jax.block_until_ready(
        teacher_model3_forward(x2, w1, b1, w2, b2, tile_b=8)
    )
    ref2 = ref_fn(x2, w1, b1, w2, b2)
    assert out2.shape == (B2, O)
    assert jnp.allclose(out2, ref2, atol=1e-5, rtol=1e-5)

    # bf16 streaming path (halves HBM bytes for the mem-bound large-B case),
    # f32 accumulation inside the kernel.
    out3 = jax.block_until_ready(
        teacher_model3_forward(x2, w1, b1, w2, b2, compute_dtype=jnp.bfloat16)
    )
    ref3 = ref_fn(
        x2.astype(jnp.bfloat16).astype(jnp.float32),
        w1.astype(jnp.bfloat16).astype(jnp.float32),
        b1,
        w2.astype(jnp.bfloat16).astype(jnp.float32),
        b2,
    )
    assert out3.shape == (B2, O)
    assert jnp.allclose(out3.astype(jnp.float32), ref3, atol=5e-2, rtol=5e-2)

    print("KERNEL_OK")
</pallas_src>

<mosaic_0001>
module attributes {stable_mosaic.version = 11 : i64} {
  func.func @_mlp_kernel(%arg0: i32, %arg1: memref<8x32xf32, #tpu.memory_space<vmem>>, %arg2: memref<32x256xf32, #tpu.memory_space<vmem>>, %arg3: memref<1x256xf32, #tpu.memory_space<vmem>>, %arg4: memref<1x256xf32, #tpu.memory_space<vmem>>, %arg5: memref<1x1xf32, #tpu.memory_space<vmem>>, %arg6: memref<1x8xf32, #tpu.memory_space<vmem>>) attributes {dimension_semantics = [#tpu.dimension_semantics<parallel>], iteration_bounds = array<i64: 1>, scalar_prefetch = 0 : i64, scratch_operands = 0 : i64, tpu.core_type = #tpu.core_type<tc>, window_params = [{transform_indices = @transform_0, window_bounds = array<i64: 8, 32>}, {pipeline_mode = #tpu.pipeline_mode<synchronous>, transform_indices = @transform_1, window_bounds = array<i64: 32, 256>}, {pipeline_mode = #tpu.pipeline_mode<synchronous>, transform_indices = @transform_2, window_bounds = array<i64: 1, 256>}, {pipeline_mode = #tpu.pipeline_mode<synchronous>, transform_indices = @transform_3, window_bounds = array<i64: 1, 256>}, {pipeline_mode = #tpu.pipeline_mode<synchronous>, transform_indices = @transform_4, window_bounds = array<i64: 1, 1>}, {transform_indices = @transform_5, window_bounds = array<i64: 1, 8>}]} {
    %c0 = arith.constant 0 : index
    %c0_0 = arith.constant 0 : index
    %0 = vector.load %arg1[%c0, %c0_0] : memref<8x32xf32, #tpu.memory_space<vmem>>, vector<8x32xf32>
    %c0_1 = arith.constant 0 : index
    %c0_2 = arith.constant 0 : index
    %1 = vector.load %arg2[%c0_1, %c0_2] : memref<32x256xf32, #tpu.memory_space<vmem>>, vector<32x256xf32>
    %cst = arith.constant dense<0.000000e+00> : vector<8x256xf32>
    %2 = tpu.matmul %0, %1, %cst {dimension_numbers = #tpu.dot_dimension_numbers<[1], [0], [0], [1], [0, 0, 1, 1], [], []>} : vector<8x32xf32>, vector<32x256xf32>, vector<8x256xf32> -> vector<8x256xf32>
    %c0_3 = arith.constant 0 : index
    %c0_4 = arith.constant 0 : index
    %3 = vector.load %arg3[%c0_3, %c0_4] : memref<1x256xf32, #tpu.memory_space<vmem>>, vector<1x256xf32>
    %4 = vector.broadcast %3 : vector<1x256xf32> to vector<8x256xf32>
    %5 = arith.addf %2, %4 : vector<8x256xf32>
    %cst_5 = arith.constant 0.000000e+00 : f32
    %6 = vector.broadcast %cst_5 : f32 to vector<8x256xf32>
    %7 = arith.maximumf %5, %6 : vector<8x256xf32>
    %c0_6 = arith.constant 0 : index
    %c0_7 = arith.constant 0 : index
    %8 = vector.load %arg4[%c0_6, %c0_7] : memref<1x256xf32, #tpu.memory_space<vmem>>, vector<1x256xf32>
    %9 = vector.broadcast %8 : vector<1x256xf32> to vector<8x256xf32>
    %10 = arith.mulf %7, %9 : vector<8x256xf32>
    %cst_8 = arith.constant dense<0.000000e+00> : vector<8xf32>
    %11 = vector.multi_reduction <add>, %10, %cst_8 [1] : vector<8x256xf32> to vector<8xf32>
    %12 = vector.shape_cast %11 : vector<8xf32> to vector<1x8xf32>
    %c0_9 = arith.constant 0 : index
    %c0_10 = arith.constant 0 : index
    %13 = vector.load %arg5[%c0_9, %c0_10] : memref<1x1xf32, #tpu.memory_space<vmem>>, vector<1x1xf32>
    %14 = vector.broadcast %13 : vector<1x1xf32> to vector<1x8xf32>
    %15 = arith.addf %12, %14 : vector<1x8xf32>
    %c0_11 = arith.constant 0 : index
    %c0_12 = arith.constant 0 : index
    %16 = vector.load %arg6[%c0_11, %c0_12] : memref<1x8xf32, #tpu.memory_space<vmem>>, vector<1x8xf32>
    tpu.vector_store %arg6[%c0_11, %c0_12], %15 {strides = array<i32>} : memref<1x8xf32, #tpu.memory_space<vmem>>, vector<1x8xf32>,
    return
  }
  func.func @transform_0(%arg0: i32) -> (i32, i32) {
    %c0_i32 = arith.constant 0 : i32
    %c0_i32_0 = arith.constant 0 : i32
    return %arg0, %c0_i32 : i32, i32
  }
  func.func @transform_1(%arg0: i32) -> (i32, i32) {
    %c0_i32 = arith.constant 0 : i32
    %c0_i32_0 = arith.constant 0 : i32
    %c0_i32_1 = arith.constant 0 : i32
    return %c0_i32, %c0_i32_0 : i32, i32
  }
  func.func @transform_2(%arg0: i32) -> (i32, i32) {
    %c0_i32 = arith.constant 0 : i32
    %c0_i32_0 = arith.constant 0 : i32
    %c0_i32_1 = arith.constant 0 : i32
    return %c0_i32, %c0_i32_0 : i32, i32
  }
  func.func @transform_3(%arg0: i32) -> (i32, i32) {
    %c0_i32 = arith.constant 0 : i32
    %c0_i32_0 = arith.constant 0 : i32
    %c0_i32_1 = arith.constant 0 : i32
    return %c0_i32, %c0_i32_0 : i32, i32
  }
  func.func @transform_4(%arg0: i32) -> (i32, i32) {
    %c0_i32 = arith.constant 0 : i32
    %c0_i32_0 = arith.constant 0 : i32
    %c0_i32_1 = arith.constant 0 : i32
    return %c0_i32, %c0_i32_0 : i32, i32
  }
  func.func @transform_5(%arg0: i32) -> (i32, i32) {
    %c0_i32 = arith.constant 0 : i32
    %c0_i32_0 = arith.constant 0 : i32
    return %arg0, %c0_i32 : i32, i32
  }
}

</mosaic_0001>

<llo_original>
// kernel: tpu_custom_call.1
$region0: #{tpu_custom_call.1}
  #allocation0 [shape = 'u32[]', space=smem, size = 0x4, offset = 0x4, fixed_abs, tag = 'smem constant byte address 0x4 - core index']
  #allocation1 [shape = 'u32[144,128]{1,0:T(1,128)}', space=vmem, size = 0x12000, scoped, tag = 'internal scratch']
  #allocation2 [shape = 'f32[1,1]{1,0:T(1,128)S(1)}', space=vmem, size = 0x200, scoped, tag = 'scoped memory for tpu_custom_call.1']
  %s0 = inlined_call_operand.hbm [shape: f32[8,32], index: 0, kind: input, shape index: {}]
  %s1 = inlined_call_operand.hbm [shape: f32[32,256], index: 1, kind: input, shape index: {}]
  %s2 = inlined_call_operand.vmem [shape: f32[1,256], index: 2, kind: input, shape index: {}]
  %s3 = inlined_call_operand.vmem [shape: f32[1,256], index: 3, kind: input, shape index: {}]
  %s4 = inlined_call_operand.<no memory space> [shape: f32[1,1], index: 4, kind: input, shape index: {}]
  %s5 = inlined_call_operand.hbm [shape: f32[1,8], index: 5, kind: output, shape index: {}]
  %s6 = sld [smem:[#allocation0]]
  $region38: #{tpu_custom_call.1} parent=0
    _
  %s8 = ssub.s32 1, %s6
  %s9 = scalar_select 0, %s8, %s6
  %v10 = vstv %s4
  %11 = vst [vmem:[#allocation2] sm:$0x1] %v10
  $region1: #{tpu_custom_call.1} parent=0
    #allocation3 [shape = 'u8[4096]{0}', space=vmem, size = 0x1000, scoped, tag = 'input window, operand 0, single buffered']
    #allocation4 [shape = 's32[1]{0}', space=sflag, size = 0x4, scoped, tag = 'scoped memory for tpu_custom_call.1']
    #allocation5 [shape = 's32[1]{0}', space=sflag, size = 0x4, scoped, tag = 'scoped memory for tpu_custom_call.1']
    #allocation6 [shape = 'u8[32768]{0}', space=vmem, size = 0x8000, scoped, tag = 'input window, operand 1, single buffered']
    #allocation7 [shape = 's32[1]{0}', space=sflag, size = 0x4, scoped, tag = 'scoped memory for tpu_custom_call.1']
    #allocation8 [shape = 'u8[512]{0}', space=vmem, size = 0x400, scoped, tag = 'output window, operand 0, single buffered']
    %12 = vsyncpa [#allocation4], 0
    %13 = vsyncpa [#allocation7], 0
    %14 = vsyncpa [#allocation5], 0
    // Predicated region
    $region2: #{tpu_custom_call.1} parent=1 // pred_check
      _
    $region3: #{tpu_custom_call.1} parent=1 // pred_check_branch
      %16 = sbr.rel (0) target = $region5
    $region4: #{tpu_custom_call.1} parent=1 // pred_region
      %s18 = ssub.s32 128, 128
      %19 = vsyncadd [#allocation4], %s18
      %s21 = sshll.u32 [#allocation3], 4
      %s22 = int_to_ptr.vmem [resolvable:$true] %s21
      %24 = dma.hbm_to_vmem [thread:$0]  %s0, 128, %s22, [#allocation4]
    $region5: #{tpu_custom_call.1} parent=1 // pred_fallthru
      _
    // Predicated region
    $region6: #{tpu_custom_call.1} parent=1 // pred_check
      _
    $region7: #{tpu_custom_call.1} parent=1 // pred_check_branch
      %26 = sbr.rel (0) target = $region9
    $region8: #{tpu_custom_call.1} parent=1 // pred_region
      %s28 = ssub.s32 1024, 1024
      %29 = vsyncadd [#allocation7], %s28
      %s30 = sshll.u32 [#allocation6], 4
      %s31 = int_to_ptr.vmem [resolvable:$true] %s30
      %36 = dma.hbm_to_vmem [thread:$0]  %s1, 1024, %s31, [#allocation7], 256, 256, 16
    $region9: #{tpu_custom_call.1} parent=1 // pred_fallthru
      _
    // Predicated region
    $region10: #{tpu_custom_call.1} parent=1 // pred_check
      _
    $region11: #{tpu_custom_call.1} parent=1 // pred_check_branch
      %38 = sbr.rel (0) target = $region13
    $region12: #{tpu_custom_call.1} parent=1 // pred_region
      _
    $region13: #{tpu_custom_call.1} parent=1 // pred_fallthru
      _
    // Predicated region
    $region14: #{tpu_custom_call.1} parent=1 // pred_check
      _
    $region15: #{tpu_custom_call.1} parent=1 // pred_check_branch
      %40 = sbr.rel (0) target = $region17
    $region16: #{tpu_custom_call.1} parent=1 // pred_region
      _
    $region17: #{tpu_custom_call.1} parent=1 // pred_fallthru
      _
    // Predicated region
    $region18: #{tpu_custom_call.1} parent=1 // pred_check
      _
    $region19: #{tpu_custom_call.1} parent=1 // pred_check_branch
      %42 = sbr.rel (0) target = $region21
    $region20: #{tpu_custom_call.1} parent=1 // pred_region
      _
    $region21: #{tpu_custom_call.1} parent=1 // pred_fallthru
      _
    // Predicated region
    $region22: #{tpu_custom_call.1} parent=1 // pred_check
      _
    $region23: #{tpu_custom_call.1} parent=1 // pred_check_branch
      %44 = sbr.rel (0) target = $region25
    $region24: #{tpu_custom_call.1} parent=1 // pred_region
      %45 = dma.done [#allocation4], 128
    $region25: #{tpu_custom_call.1} parent=1 // pred_fallthru
      _
    // Predicated region
    $region26: #{tpu_custom_call.1} parent=1 // pred_check
      _
    $region27: #{tpu_custom_call.1} parent=1 // pred_check_branch
      %47 = sbr.rel (0) target = $region29
    $region28: #{tpu_custom_call.1} parent=1 // pred_region
      %48 = dma.done [#allocation7], 1024
    $region29: #{tpu_custom_call.1} parent=1 // pred_fallthru
      _
    %v49 = vld [vmem:[#allocation3] sm:$0xff]
    %v50 = vld [vmem:[#allocation6] sm:$0xff]
    %v51 = vld [vmem:[#allocation6 + $0x8] sm:$0xff]
    %v52 = vld [vmem:[#allocation6 + $0x10] sm:$0xff]
    %v53 = vld [vmem:[#allocation6 + $0x18] sm:$0xff]
    %v54 = vld [vmem:[#allocation6 + $0x20] sm:$0xff]
    %v55 = vld [vmem:[#allocation6 + $0x28] sm:$0xff]
    %v56 = vld [vmem:[#allocation6 + $0x30] sm:$0xff]
    %v57 = vld [vmem:[#allocation6 + $0x38] sm:$0xff]
    %v58 = vld [vmem:[%s2] sm:$0x3]
    %v60 = vlaneseq
    %v61 = vshrl.u32 %v60, 7
    %v62 = vsub.s32 0, %v61
    %v63 = vrot.slane %v58, %v62
    %v64 = vlaneseq
    %v65 = vshrl.u32 %v64, 7
    %v66 = vsub.s32 1, %v65
    %v67 = vrot.slane %v58, %v66
    %vm70 = vcmask 261120
    %v72 = vsel %vm70, %v49, 0
    %74 = vmatprep.subr.mxu0 %v51
    %75 = vmatpush1.msra.mxu0 %v50
    %76 = vmatprep.subr.mxu0 %v53
    %77 = vmatpush1.msra.mxu0 %v52
    %78 = vmatprep.subr.mxu0 %v55
    %79 = vmatpush1.msra.mxu0 %v54
    %80 = vmatprep.subr.mxu0 %v57
    %81 = vmatpush1.msra.mxu0 %v56
    %82 = vmatprep.subr.mxu0 0.0
    %83 = vmatpush1.msra.mxu0 0.0
    %84 = vmatprep.subr.mxu0 0.0
    %85 = vmatpush1.msra.mxu0 0.0
    %86 = vmatprep.subr.mxu0 0.0
    %87 = vmatpush1.msra.mxu0 0.0
    %88 = vmatprep.subr.mxu0 0.0
    %89 = vmatpush1.msra.mxu0 0.0
    %90 = vmatprep.subr.mxu0 0.0
    %91 = vmatpush1.msra.mxu0 0.0
    %92 = vmatprep.subr.mxu0 0.0
    %93 = vmatpush1.msra.mxu0 0.0
    %94 = vmatprep.subr.mxu0 0.0
    %95 = vmatpush1.msra.mxu0 0.0
    %96 = vmatprep.subr.mxu0 0.0
    %97 = vmatpush1.msra.mxu0 0.0
    %98 = vmatprep.subr.mxu0 0.0
    %99 = vmatpush1.msra.mxu0 0.0
    %100 = vmatprep.subr.mxu0 0.0
    %101 = vmatpush1.msra.mxu0 0.0
    %102 = vmatprep.subr.mxu0 0.0
    %103 = vmatpush1.msra.mxu0 0.0
    %104 = vmatprep.subr.mxu0 0.0
    %105 = vmatpush1.msra.mxu0 0.0
    %106 = vmatprep.subr.mxu0 0.0
    %107 = vmatpush1.msra.mxu0 0.0
    %108 = vmatprep.subr.mxu0 0.0
    %109 = vmatpush1.msra.mxu0 0.0
    %110 = vmatprep.subr.mxu0 0.0
    %111 = vmatpush1.msra.mxu0 0.0
    %112 = vmatprep.subr.mxu0 0.0
    %113 = vmatpush1.msra.mxu0 0.0
    %114 = vmatprep.subr.mxu0 0.0
    %115 = vmatpush1.msra.mxu0 0.0
    %116 = vmatprep.subr.mxu0 0.0
    %117 = vmatpush1.msra.mxu0 0.0
    %118 = vmatprep.subr.mxu0 0.0
    %119 = vmatpush1.msra.mxu0 0.0
    %120 = vmatprep.subr.mxu0 0.0
    %121 = vmatpush1.msra.mxu0 0.0
    %122 = vmatprep.subr.mxu0 0.0
    %123 = vmatpush1.msra.mxu0 0.0
    %124 = vmatprep.subr.mxu0 0.0
    %125 = vmatpush1.msra.mxu0 0.0
    %126 = vmatprep.subr.mxu0 0.0
    %127 = vmatpush1.msra.mxu0 0.0
    %128 = vmatprep.subr.mxu0 0.0
    %129 = vmatpush1.msra.mxu0 0.0
    %130 = vmatprep.subr.mxu0 0.0
    %131 = vmatpush1.msra.mxu0 0.0
    %132 = vmatprep.subr.mxu0 0.0
    %133 = vmatpush1.msra.mxu0 0.0
    %134 = vmatprep.subr.mxu0 0.0
    %135 = vmatpush1.msra.mxu0 0.0
    %136 = vmatprep.subr.mxu0 0.0
    %137 = vmatpush1.msra.mxu0 0.0
    %138 = vmatprep.mubr.f32.mxu0 0.0
    %139 = vmatmul.mubr.f32.gmra.mrb[0].mxu0 %v72
    %v140 = vpop.f32.mrb[0].mxu0
    %v141 = vadd.f32 %v63, %v140
    %v142 = vpop.f32.mrb[0].mxu0
    %v143 = vadd.f32 %v67, %v142
    %144 = vdwg.mxu0
    %v145 = vmax.f32 %v141, 0.0
    %v146 = vmax.f32 %v143, 0.0
    %v147 = vld [vmem:[%s3] sm:$0x3]
    %v149 = vlaneseq
    %v150 = vshrl.u32 %v149, 7
    %v151 = vsub.s32 0, %v150
    %v152 = vrot.slane %v147, %v151
    %v153 = vlaneseq
    %v154 = vshrl.u32 %v153, 7
    %v155 = vsub.s32 1, %v154
    %v156 = vrot.slane %v147, %v155
    %v159 = vmul.f32 %v145, %v152
    %v160 = vmul.f32 %v146, %v156
    %v161 = vadd.f32 %v159, %v160
    %162 = vadd.xlane.f32.xlu0 %v161
    %v163 = vpop.xlane.xlu0 %162
    %v164 = vld [vmem:[#allocation2] sm:$0x1]
    %166 = vset.pattern.permute.xlu0 0
    %167 = vperm.xlu0 %166, %v164
    %v168 = vpop.permute.xlu0 %167
    %v170 = vlaneseq
    %v171 = vshrl.u32 %v170, 7
    %v172 = vsub.s32 0, %v171
    %v173 = vrot.slane %v168, %v172
    %v174 = vadd.f32 %v163, %v173
    %v176 = vlaneseq
    %v177 = vand.u32 %v176, 127
    %v178 = vlaneseq
    %v179 = vshrl.u32 %v178, 7
    %v180 = vsub.s32 %v177, %v179
    %v181 = vrot.slane %v174, %v180
    %vm183 = vcmask 57344
    %184 = vst.msk [vmem:[#allocation8] sm:$0x1] %vm183, %v181
    // Predicated region
    $region30: #{tpu_custom_call.1} parent=1 // pred_check
      _
    $region31: #{tpu_custom_call.1} parent=1 // pred_check_branch
      %186 = sbr.rel (0) target = $region33
    $region32: #{tpu_custom_call.1} parent=1 // pred_region
      %s188 = ssub.s32 16, 16
      %189 = vsyncadd [#allocation5], %s188
      %s191 = sshll.u32 [#allocation8], 4
      %s192 = int_to_ptr.vmem [resolvable:$true] %s191
      %194 = dma.vmem_to_hbm [thread:$0]  %s192, 16, %s5, [#allocation5]
    $region33: #{tpu_custom_call.1} parent=1 // pred_fallthru
      _
    // Predicated region
    $region34: #{tpu_custom_call.1} parent=1 // pred_check
      _
    $region35: #{tpu_custom_call.1} parent=1 // pred_check_branch
      %196 = sbr.rel (0) target = $region37
    $region36: #{tpu_custom_call.1} parent=1 // pred_region
      %197 = dma.done [#allocation5], 16
    $region37: #{tpu_custom_call.1} parent=1 // pred_fallthru
      _
    %198 = vsyncpa [#allocation4], 1
    %199 = vsyncpa [#allocation7], 1
    %200 = vsyncpa [#allocation5], 1

</llo_original>
